<compile_context>
chip_gen: v5e
topology: v5e:2x2
jax: 0.10.0
libtpu: 0.0.40
codegen_flags: <defaults>
</compile_context>

<pallas_src>
import functools

import jax
import jax.numpy as jnp
from jax.experimental import pallas as pl
from jax.experimental.pallas import tpu as pltpu


def _vae_kernel(x_ref, eps_ref,
                w1_ref, b1_ref, wh_ref, bh_ref,
                wd1_ref, bd1_ref, wd2_ref, bd2_ref,
                out_ref, *, latent_dim, bf16_matmul):
    def mm(a, w):
        if bf16_matmul:
            a = a.astype(jnp.bfloat16)
            w = w.astype(jnp.bfloat16)
        return jnp.dot(a, w, preferred_element_type=jnp.float32)

    x = x_ref[...].astype(jnp.float32)                                 # (bm, D)

    # ---- encoder trunk ----
    h = jnp.maximum(mm(x, w1_ref[...]) + b1_ref[...], 0.0)             # (bm, H)

    # ---- fused (mu || log_std) head: one matmul with 2*Z output lanes ----
    head = mm(h, wh_ref[...]) + bh_ref[...]                            # (bm, 2Z)
    mu = head[:, :latent_dim]
    log_std = head[:, latent_dim:]
    std = jnp.exp(log_std)                                             # EUP

    # ---- reparameterized sample (rsample) ----
    # TODO(synk): eps could be generated in-kernel via pltpu.prng_seed +
    # pltpu.stateful_normal to drop one HBM input stream; kept as an explicit
    # input for deterministic reference checking.
    z = mu + std * eps_ref[...].astype(jnp.float32)                    # (bm, Z)

    # ---- decoder ----
    hd = jnp.maximum(mm(z, wd1_ref[...]) + bd1_ref[...], 0.0)          # (bm, H)
    recon = mm(hd, wd2_ref[...]) + bd2_ref[...]                        # (bm, D)

    # single lane-packed output slab: [ recon | mu | std ] -> one store stream
    out_ref[...] = jnp.concatenate([recon, mu, std], axis=-1).astype(out_ref.dtype)


def vae_forward(state, eps, params, *, bm=None, bf16_matmul=False):
    """Fused VAE forward. Returns (recon, (mu, std)) — q_z given by its parameters."""
    B, D = state.shape
    Z = eps.shape[1]

    if bm is None:
        bm = B if B <= 256 else 256      # single grid step for small batches
    assert B % bm == 0 and bm % 8 == 0
    grid = (B // bm,)

    # Fuse the mu / log_std projections into a single (H, 2Z) matmul.
    w_head = jnp.concatenate([params["w_mu"], params["w_ls"]], axis=1)   # (H, 2Z)
    b_head = jnp.concatenate([params["b_mu"], params["b_ls"]], axis=1)   # (1, 2Z)

    def batch_spec(cols):
        return pl.BlockSpec((bm, cols), lambda i: (i, 0))

    # Weights / biases: whole-array resident in VMEM (no per-step tiling or
    # double-buffering — they never change across grid steps).
    vmem_spec = pl.BlockSpec(memory_space=pltpu.MemorySpace.VMEM)

    in_specs = [
        batch_spec(D),              # state tile
        batch_spec(Z),              # eps tile
        vmem_spec, vmem_spec,       # w1, b1
        vmem_spec, vmem_spec,       # w_head, b_head
        vmem_spec, vmem_spec,       # wd1, bd1
        vmem_spec, vmem_spec,       # wd2, bd2
    ]
    out_cols = D + 2 * Z
    out_specs = pl.BlockSpec((bm, out_cols), lambda i: (i, 0))
    out_shape = jax.ShapeDtypeStruct((B, out_cols), jnp.float32)

    kernel = functools.partial(_vae_kernel, latent_dim=Z, bf16_matmul=bf16_matmul)

    packed = pl.pallas_call(
        kernel,
        out_shape=out_shape,
        grid=grid,
        in_specs=in_specs,
        out_specs=out_specs,
        compiler_params=pltpu.CompilerParams(
            dimension_semantics=("parallel",)),   # shards batch tiles across TCs (v7x)
    )(state, eps,
      params["w1"], params["b1"],
      w_head, b_head,
      params["wd1"], params["bd1"],
      params["wd2"], params["bd2"])

    recon = packed[:, :D]
    mu = packed[:, D:D + Z]
    std = packed[:, D + Z:]
    return recon, (mu, std)


def _init_params(key, D, H, Z):
    ks = jax.random.split(key, 5)

    def lin(k, fan_in, fan_out):
        w = jax.random.normal(k, (fan_in, fan_out), jnp.float32) * (1.0 / jnp.sqrt(fan_in))
        b = jnp.zeros((1, fan_out), jnp.float32)
        return w, b

    w1, b1 = lin(ks[0], D, H)
    w_mu, b_mu = lin(ks[1], H, Z)
    w_ls, b_ls = lin(ks[2], H, Z)
    wd1, bd1 = lin(ks[3], Z, H)
    wd2, bd2 = lin(ks[4], H, D)
    return dict(w1=w1, b1=b1, w_mu=w_mu, b_mu=b_mu, w_ls=w_ls, b_ls=b_ls,
                wd1=wd1, bd1=bd1, wd2=wd2, bd2=bd2)


if __name__ == "__main__":
    B, D, H, Z = 16, 16, 32, 8          # batch, state_dim, hidden, latent
    key = jax.random.PRNGKey(0)
    k_state, k_eps, k_params = jax.random.split(key, 3)

    state = jax.random.normal(k_state, (B, D), jnp.float32)
    eps = jax.random.normal(k_eps, (B, Z), jnp.float32)   # reparameterization noise
    params = _init_params(k_params, D, H, Z)

    # f32 path (exact reference match)
    recon, (mu, std) = vae_forward(state, eps, params)
    jax.block_until_ready((recon, mu, std))

    # pure-JAX reference of the same math
    h = jnp.maximum(state @ params["w1"] + params["b1"], 0.0)
    mu_ref = h @ params["w_mu"] + params["b_mu"]
    std_ref = jnp.exp(h @ params["w_ls"] + params["b_ls"])
    z_ref = mu_ref + std_ref * eps
    hd = jnp.maximum(z_ref @ params["wd1"] + params["bd1"], 0.0)
    recon_ref = hd @ params["wd2"] + params["bd2"]

    assert jnp.allclose(recon, recon_ref, atol=1e-4)
    assert jnp.allclose(mu, mu_ref, atol=1e-5)
    assert jnp.allclose(std, std_ref, atol=1e-5)

    # bf16-MXU-input path (v6e/v7x fast path); elementwise math stays f32.
    recon_b, (mu_b, std_b) = vae_forward(state, eps, params, bf16_matmul=True)
    jax.block_until_ready((recon_b, mu_b, std_b))
    assert jnp.allclose(recon_b, recon_ref, atol=0.25, rtol=0.1)

    print("KERNEL_OK")
</pallas_src>

<mosaic_0001>
module attributes {stable_mosaic.version = 11 : i64} {
  func.func @_vae_kernel(%arg0: i32, %arg1: memref<16x16xf32, #tpu.memory_space<vmem>>, %arg2: memref<16x8xf32, #tpu.memory_space<vmem>>, %arg3: memref<16x32xf32, #tpu.memory_space<vmem>>, %arg4: memref<1x32xf32, #tpu.memory_space<vmem>>, %arg5: memref<32x16xf32, #tpu.memory_space<vmem>>, %arg6: memref<1x16xf32, #tpu.memory_space<vmem>>, %arg7: memref<8x32xf32, #tpu.memory_space<vmem>>, %arg8: memref<1x32xf32, #tpu.memory_space<vmem>>, %arg9: memref<32x16xf32, #tpu.memory_space<vmem>>, %arg10: memref<1x16xf32, #tpu.memory_space<vmem>>, %arg11: memref<16x32xf32, #tpu.memory_space<vmem>>) attributes {dimension_semantics = [#tpu.dimension_semantics<parallel>], iteration_bounds = array<i64: 1>, scalar_prefetch = 0 : i64, scratch_operands = 0 : i64, tpu.core_type = #tpu.core_type<tc>, window_params = [{transform_indices = @transform_0, window_bounds = array<i64: 16, 16>}, {transform_indices = @transform_1, window_bounds = array<i64: 16, 8>}, {pipeline_mode = #tpu.pipeline_mode<synchronous>, transform_indices = @transform_2, window_bounds = array<i64: 16, 32>}, {pipeline_mode = #tpu.pipeline_mode<synchronous>, transform_indices = @transform_3, window_bounds = array<i64: 1, 32>}, {pipeline_mode = #tpu.pipeline_mode<synchronous>, transform_indices = @transform_4, window_bounds = array<i64: 32, 16>}, {pipeline_mode = #tpu.pipeline_mode<synchronous>, transform_indices = @transform_5, window_bounds = array<i64: 1, 16>}, {pipeline_mode = #tpu.pipeline_mode<synchronous>, transform_indices = @transform_6, window_bounds = array<i64: 8, 32>}, {pipeline_mode = #tpu.pipeline_mode<synchronous>, transform_indices = @transform_7, window_bounds = array<i64: 1, 32>}, {pipeline_mode = #tpu.pipeline_mode<synchronous>, transform_indices = @transform_8, window_bounds = array<i64: 32, 16>}, {pipeline_mode = #tpu.pipeline_mode<synchronous>, transform_indices = @transform_9, window_bounds = array<i64: 1, 16>}, {transform_indices = @transform_10, window_bounds = array<i64: 16, 32>}]} {
    %c0 = arith.constant 0 : index
    %c0_0 = arith.constant 0 : index
    %0 = vector.load %arg1[%c0, %c0_0] : memref<16x16xf32, #tpu.memory_space<vmem>>, vector<16x16xf32>
    %c0_1 = arith.constant 0 : index
    %c0_2 = arith.constant 0 : index
    %1 = vector.load %arg3[%c0_1, %c0_2] : memref<16x32xf32, #tpu.memory_space<vmem>>, vector<16x32xf32>
    %cst = arith.constant dense<0.000000e+00> : vector<16x32xf32>
    %2 = tpu.matmul %0, %1, %cst {dimension_numbers = #tpu.dot_dimension_numbers<[1], [0], [0], [1], [0, 0, 1, 1], [], []>} : vector<16x16xf32>, vector<16x32xf32>, vector<16x32xf32> -> vector<16x32xf32>
    %c0_3 = arith.constant 0 : index
    %c0_4 = arith.constant 0 : index
    %3 = vector.load %arg4[%c0_3, %c0_4] : memref<1x32xf32, #tpu.memory_space<vmem>>, vector<1x32xf32>
    %4 = vector.broadcast %3 : vector<1x32xf32> to vector<16x32xf32>
    %5 = arith.addf %2, %4 : vector<16x32xf32>
    %cst_5 = arith.constant 0.000000e+00 : f32
    %6 = vector.broadcast %cst_5 : f32 to vector<16x32xf32>
    %7 = arith.maximumf %5, %6 : vector<16x32xf32>
    %c0_6 = arith.constant 0 : index
    %c0_7 = arith.constant 0 : index
    %8 = vector.load %arg5[%c0_6, %c0_7] : memref<32x16xf32, #tpu.memory_space<vmem>>, vector<32x16xf32>
    %cst_8 = arith.constant dense<0.000000e+00> : vector<16x16xf32>
    %9 = tpu.matmul %7, %8, %cst_8 {dimension_numbers = #tpu.dot_dimension_numbers<[1], [0], [0], [1], [0, 0, 1, 1], [], []>} : vector<16x32xf32>, vector<32x16xf32>, vector<16x16xf32> -> vector<16x16xf32>
    %c0_9 = arith.constant 0 : index
    %c0_10 = arith.constant 0 : index
    %10 = vector.load %arg6[%c0_9, %c0_10] : memref<1x16xf32, #tpu.memory_space<vmem>>, vector<1x16xf32>
    %11 = vector.broadcast %10 : vector<1x16xf32> to vector<16x16xf32>
    %12 = arith.addf %9, %11 : vector<16x16xf32>
    %13 = vector.extract_strided_slice %12 {offsets = [0, 0], sizes = [16, 8], strides = [1, 1]} : vector<16x16xf32> to vector<16x8xf32>
    %14 = vector.extract_strided_slice %12 {offsets = [0, 8], sizes = [16, 8], strides = [1, 1]} : vector<16x16xf32> to vector<16x8xf32>
    %15 = math.exp %14 : vector<16x8xf32>
    %c0_11 = arith.constant 0 : index
    %c0_12 = arith.constant 0 : index
    %16 = vector.load %arg2[%c0_11, %c0_12] : memref<16x8xf32, #tpu.memory_space<vmem>>, vector<16x8xf32>
    %17 = arith.mulf %15, %16 : vector<16x8xf32>
    %18 = arith.addf %13, %17 : vector<16x8xf32>
    %c0_13 = arith.constant 0 : index
    %c0_14 = arith.constant 0 : index
    %19 = vector.load %arg7[%c0_13, %c0_14] : memref<8x32xf32, #tpu.memory_space<vmem>>, vector<8x32xf32>
    %cst_15 = arith.constant dense<0.000000e+00> : vector<16x32xf32>
    %20 = tpu.matmul %18, %19, %cst_15 {dimension_numbers = #tpu.dot_dimension_numbers<[1], [0], [0], [1], [0, 0, 1, 1], [], []>} : vector<16x8xf32>, vector<8x32xf32>, vector<16x32xf32> -> vector<16x32xf32>
    %c0_16 = arith.constant 0 : index
    %c0_17 = arith.constant 0 : index
    %21 = vector.load %arg8[%c0_16, %c0_17] : memref<1x32xf32, #tpu.memory_space<vmem>>, vector<1x32xf32>
    %22 = vector.broadcast %21 : vector<1x32xf32> to vector<16x32xf32>
    %23 = arith.addf %20, %22 : vector<16x32xf32>
    %cst_18 = arith.constant 0.000000e+00 : f32
    %24 = vector.broadcast %cst_18 : f32 to vector<16x32xf32>
    %25 = arith.maximumf %23, %24 : vector<16x32xf32>
    %c0_19 = arith.constant 0 : index
    %c0_20 = arith.constant 0 : index
    %26 = vector.load %arg9[%c0_19, %c0_20] : memref<32x16xf32, #tpu.memory_space<vmem>>, vector<32x16xf32>
    %cst_21 = arith.constant dense<0.000000e+00> : vector<16x16xf32>
    %27 = tpu.matmul %25, %26, %cst_21 {dimension_numbers = #tpu.dot_dimension_numbers<[1], [0], [0], [1], [0, 0, 1, 1], [], []>} : vector<16x32xf32>, vector<32x16xf32>, vector<16x16xf32> -> vector<16x16xf32>
    %c0_22 = arith.constant 0 : index
    %c0_23 = arith.constant 0 : index
    %28 = vector.load %arg10[%c0_22, %c0_23] : memref<1x16xf32, #tpu.memory_space<vmem>>, vector<1x16xf32>
    %29 = vector.broadcast %28 : vector<1x16xf32> to vector<16x16xf32>
    %30 = arith.addf %27, %29 : vector<16x16xf32>
    %31 = tpu.concatenate %30, %13, %15 in 1 : vector<16x16xf32>, vector<16x8xf32>, vector<16x8xf32> -> vector<16x32xf32>
    %c0_24 = arith.constant 0 : index
    %c0_25 = arith.constant 0 : index
    %32 = vector.load %arg11[%c0_24, %c0_25] : memref<16x32xf32, #tpu.memory_space<vmem>>, vector<16x32xf32>
    tpu.vector_store %arg11[%c0_24, %c0_25], %31 {strides = array<i32>} : memref<16x32xf32, #tpu.memory_space<vmem>>, vector<16x32xf32>,
    return
  }
  func.func @transform_0(%arg0: i32) -> (i32, i32) {
    %c0_i32 = arith.constant 0 : i32
    %c0_i32_0 = arith.constant 0 : i32
    return %arg0, %c0_i32 : i32, i32
  }
  func.func @transform_1(%arg0: i32) -> (i32, i32) {
    %c0_i32 = arith.constant 0 : i32
    %c0_i32_0 = arith.constant 0 : i32
    return %arg0, %c0_i32 : i32, i32
  }
  func.func @transform_2(%arg0: i32) -> (i32, i32) {
    %c0_i32 = arith.constant 0 : i32
    %c0_i32_0 = arith.constant 0 : i32
    %c0_i32_1 = arith.constant 0 : i32
    return %c0_i32, %c0_i32_0 : i32, i32
  }
  func.func @transform_3(%arg0: i32) -> (i32, i32) {
    %c0_i32 = arith.constant 0 : i32
    %c0_i32_0 = arith.constant 0 : i32
    %c0_i32_1 = arith.constant 0 : i32
    return %c0_i32, %c0_i32_0 : i32, i32
  }
  func.func @transform_4(%arg0: i32) -> (i32, i32) {
    %c0_i32 = arith.constant 0 : i32
    %c0_i32_0 = arith.constant 0 : i32
    %c0_i32_1 = arith.constant 0 : i32
    return %c0_i32, %c0_i32_0 : i32, i32
  }
  func.func @transform_5(%arg0: i32) -> (i32, i32) {
    %c0_i32 = arith.constant 0 : i32
    %c0_i32_0 = arith.constant 0 : i32
    %c0_i32_1 = arith.constant 0 : i32
    return %c0_i32, %c0_i32_0 : i32, i32
  }
  func.func @transform_6(%arg0: i32) -> (i32, i32) {
    %c0_i32 = arith.constant 0 : i32
    %c0_i32_0 = arith.constant 0 : i32
    %c0_i32_1 = arith.constant 0 : i32
    return %c0_i32, %c0_i32_0 : i32, i32
  }
  func.func @transform_7(%arg0: i32) -> (i32, i32) {
    %c0_i32 = arith.constant 0 : i32
    %c0_i32_0 = arith.constant 0 : i32
    %c0_i32_1 = arith.constant 0 : i32
    return %c0_i32, %c0_i32_0 : i32, i32
  }
  func.func @transform_8(%arg0: i32) -> (i32, i32) {
    %c0_i32 = arith.constant 0 : i32
    %c0_i32_0 = arith.constant 0 : i32
    %c0_i32_1 = arith.constant 0 : i32
    return %c0_i32, %c0_i32_0 : i32, i32
  }
  func.func @transform_9(%arg0: i32) -> (i32, i32) {
    %c0_i32 = arith.constant 0 : i32
    %c0_i32_0 = arith.constant 0 : i32
    %c0_i32_1 = arith.constant 0 : i32
    return %c0_i32, %c0_i32_0 : i32, i32
  }
  func.func @transform_10(%arg0: i32) -> (i32, i32) {
    %c0_i32 = arith.constant 0 : i32
    %c0_i32_0 = arith.constant 0 : i32
    return %arg0, %c0_i32 : i32, i32
  }
}

</mosaic_0001>

<llo_original>
// kernel: tpu_custom_call.1
$region0: #{tpu_custom_call.1}
  #allocation0 [shape = 'u32[]', space=smem, size = 0x4, offset = 0x4, fixed_abs, tag = 'smem constant byte address 0x4 - core index']
  #allocation1 [shape = 'u32[72,128]{1,0:T(1,128)}', space=vmem, size = 0x9000, scoped, tag = 'internal scratch']
  %s0 = inlined_call_operand.vmem [shape: f32[16,16], index: 0, kind: input, shape index: {}]
  %s1 = inlined_call_operand.vmem [shape: f32[16,8], index: 1, kind: input, shape index: {}]
  %s2 = inlined_call_operand.vmem [shape: f32[16,32], index: 2, kind: input, shape index: {}]
  %s3 = inlined_call_operand.vmem [shape: f32[1,32], index: 3, kind: input, shape index: {}]
  %s4 = inlined_call_operand.vmem [shape: f32[32,16], index: 4, kind: input, shape index: {}]
  %s5 = inlined_call_operand.vmem [shape: f32[1,16], index: 5, kind: input, shape index: {}]
  %s6 = inlined_call_operand.vmem [shape: f32[8,32], index: 6, kind: input, shape index: {}]
  %s7 = inlined_call_operand.vmem [shape: f32[1,32], index: 7, kind: input, shape index: {}]
  %s8 = inlined_call_operand.vmem [shape: f32[32,16], index: 8, kind: input, shape index: {}]
  %s9 = inlined_call_operand.vmem [shape: f32[1,16], index: 9, kind: input, shape index: {}]
  %s10 = inlined_call_operand.hbm [shape: f32[16,32], index: 10, kind: output, shape index: {}]
  %s11 = sld [smem:[#allocation0]]
  $region50: #{tpu_custom_call.1} parent=0
    _
  %s13 = ssub.s32 1, %s11
  %s14 = scalar_select 0, %s13, %s11
  $region1: #{tpu_custom_call.1} parent=0
    #allocation2 [shape = 'u8[8192]{0}', space=vmem, size = 0x2000, scoped, tag = 'output window, operand 0, single buffered']
    #allocation3 [shape = 's32[1]{0}', space=sflag, size = 0x4, scoped, tag = 'scoped memory for tpu_custom_call.1']
    %15 = vsyncpa [#allocation3], 0
    // Predicated region
    $region2: #{tpu_custom_call.1} parent=1 // pred_check
      _
    $region3: #{tpu_custom_call.1} parent=1 // pred_check_branch
      %17 = sbr.rel (0) target = $region5
    $region4: #{tpu_custom_call.1} parent=1 // pred_region
      _
    $region5: #{tpu_custom_call.1} parent=1 // pred_fallthru
      _
    // Predicated region
    $region6: #{tpu_custom_call.1} parent=1 // pred_check
      _
    $region7: #{tpu_custom_call.1} parent=1 // pred_check_branch
      %19 = sbr.rel (0) target = $region9
    $region8: #{tpu_custom_call.1} parent=1 // pred_region
      _
    $region9: #{tpu_custom_call.1} parent=1 // pred_fallthru
      _
    // Predicated region
    $region10: #{tpu_custom_call.1} parent=1 // pred_check
      _
    $region11: #{tpu_custom_call.1} parent=1 // pred_check_branch
      %21 = sbr.rel (0) target = $region13
    $region12: #{tpu_custom_call.1} parent=1 // pred_region
      _
    $region13: #{tpu_custom_call.1} parent=1 // pred_fallthru
      _
    // Predicated region
    $region14: #{tpu_custom_call.1} parent=1 // pred_check
      _
    $region15: #{tpu_custom_call.1} parent=1 // pred_check_branch
      %23 = sbr.rel (0) target = $region17
    $region16: #{tpu_custom_call.1} parent=1 // pred_region
      _
    $region17: #{tpu_custom_call.1} parent=1 // pred_fallthru
      _
    // Predicated region
    $region18: #{tpu_custom_call.1} parent=1 // pred_check
      _
    $region19: #{tpu_custom_call.1} parent=1 // pred_check_branch
      %25 = sbr.rel (0) target = $region21
    $region20: #{tpu_custom_call.1} parent=1 // pred_region
      _
    $region21: #{tpu_custom_call.1} parent=1 // pred_fallthru
      _
    // Predicated region
    $region22: #{tpu_custom_call.1} parent=1 // pred_check
      _
    $region23: #{tpu_custom_call.1} parent=1 // pred_check_branch
      %27 = sbr.rel (0) target = $region25
    $region24: #{tpu_custom_call.1} parent=1 // pred_region
      _
    $region25: #{tpu_custom_call.1} parent=1 // pred_fallthru
      _
    // Predicated region
    $region26: #{tpu_custom_call.1} parent=1 // pred_check
      _
    $region27: #{tpu_custom_call.1} parent=1 // pred_check_branch
      %29 = sbr.rel (0) target = $region29
    $region28: #{tpu_custom_call.1} parent=1 // pred_region
      _
    $region29: #{tpu_custom_call.1} parent=1 // pred_fallthru
      _
    // Predicated region
    $region30: #{tpu_custom_call.1} parent=1 // pred_check
      _
    $region31: #{tpu_custom_call.1} parent=1 // pred_check_branch
      %31 = sbr.rel (0) target = $region33
    $region32: #{tpu_custom_call.1} parent=1 // pred_region
      _
    $region33: #{tpu_custom_call.1} parent=1 // pred_fallthru
      _
    // Predicated region
    $region34: #{tpu_custom_call.1} parent=1 // pred_check
      _
    $region35: #{tpu_custom_call.1} parent=1 // pred_check_branch
      %33 = sbr.rel (0) target = $region37
    $region36: #{tpu_custom_call.1} parent=1 // pred_region
      _
    $region37: #{tpu_custom_call.1} parent=1 // pred_fallthru
      _
    // Predicated region
    $region38: #{tpu_custom_call.1} parent=1 // pred_check
      _
    $region39: #{tpu_custom_call.1} parent=1 // pred_check_branch
      %35 = sbr.rel (0) target = $region41
    $region40: #{tpu_custom_call.1} parent=1 // pred_region
      _
    $region41: #{tpu_custom_call.1} parent=1 // pred_fallthru
      _
    %v36 = vld [vmem:[%s0] sm:$0xff]
    %v37 = vld [vmem:[%s0 + $0x8] sm:$0xff]
    %v38 = vld [vmem:[%s2] sm:$0xff]
    %v39 = vld [vmem:[%s2 + $0x8] sm:$0xff]
    %v40 = vld [vmem:[%s3] sm:$0x1]
    %v42 = vperm.slane %v40, 0
    %vm44 = vcmask 130048
    %v46 = vsel %vm44, %v36, 0
    %v49 = vsel %vm44, %v37, 0
    %51 = vmatpush.msra.mxu0 0.0
    %52 = vmatpush.msra.mxu0 0.0
    %53 = vmatpush.msra.mxu0 0.0
    %54 = vmatpush.msra.mxu0 0.0
    %55 = vmatpush.msra.mxu0 0.0
    %56 = vmatpush.msra.mxu0 0.0
    %57 = vmatpush.msra.mxu0 0.0
    %58 = vmatpush.msra.mxu0 0.0
    %59 = vmatpush.msra.mxu0 0.0
    %60 = vmatpush.msra.mxu0 0.0
    %61 = vmatpush.msra.mxu0 0.0
    %62 = vmatpush.msra.mxu0 0.0
    %63 = vmatpush.msra.mxu0 0.0
    %64 = vmatpush.msra.mxu0 0.0
    %65 = vmatpush.msra.mxu0 %v39
    %66 = vmatpush.msra.mxu0 %v38
    %67 = vmatmul.f32.gmra.mxu0 %v46
    %v68 = vpop.f32.mrf.mxu0
    %v69 = vadd.f32 %v42, %v68
    %70 = vmatmul.f32.gmra.mxu0 %v49
    %v71 = vpop.f32.mrf.mxu0
    %v72 = vadd.f32 %v42, %v71
    %73 = vdwg.mxu0
    %v74 = vmax.f32 %v69, 0.0
    %v75 = vmax.f32 %v72, 0.0
    %v76 = vld [vmem:[%s4] sm:$0xff]
    %v77 = vld [vmem:[%s4 + $0x8] sm:$0xff]
    %v78 = vld [vmem:[%s4 + $0x10] sm:$0xff]
    %v79 = vld [vmem:[%s4 + $0x18] sm:$0xff]
    %v80 = vld [vmem:[%s5] sm:$0x1]
    %v82 = vperm.slane %v80, 0
    %vm84 = vcmask 261120
    %v86 = vsel %vm84, %v74, 0
    %v89 = vsel %vm84, %v75, 0
    %91 = vmatpush.msra.mxu0 0.0
    %92 = vmatpush.msra.mxu0 0.0
    %93 = vmatpush.msra.mxu0 0.0
    %94 = vmatpush.msra.mxu0 0.0
    %95 = vmatpush.msra.mxu0 0.0
    %96 = vmatpush.msra.mxu0 0.0
    %97 = vmatpush.msra.mxu0 0.0
    %98 = vmatpush.msra.mxu0 0.0
    %99 = vmatpush.msra.mxu0 0.0
    %100 = vmatpush.msra.mxu0 0.0
    %101 = vmatpush.msra.mxu0 0.0
    %102 = vmatpush.msra.mxu0 0.0
    %103 = vmatpush.msra.mxu0 %v79
    %104 = vmatpush.msra.mxu0 %v78
    %105 = vmatpush.msra.mxu0 %v77
    %106 = vmatpush.msra.mxu0 %v76
    %107 = vmatmul.f32.gmra.mxu0 %v86
    %v108 = vpop.f32.mrf.mxu0
    %v109 = vadd.f32 %v82, %v108
    %110 = vmatmul.f32.gmra.mxu0 %v89
    %v111 = vpop.f32.mrf.mxu0
    %v112 = vadd.f32 %v82, %v111
    %113 = vdwg.mxu0
    %v114 = vmul.f32 %v109, 1.442695
    %v115 = vpow.pop %v114
    %v116 = vmul.f32 %v112, 1.442695
    %v117 = vpow.pop %v116
    %v118 = vld [vmem:[%s1] sm:$0xff]
    %v119 = vld [vmem:[%s1 + $0x8] sm:$0xff]
    %122 = vrot.lane.b32.xlu0 %v118, 8
    %v123 = vpop.permute.xlu0 %122
    %124 = vrot.lane.b32.xlu0 %v119, 8
    %v125 = vpop.permute.xlu0 %124
    %v128 = vmul.f32 %v115, %v123
    %v129 = vmul.f32 %v117, %v125
    %132 = vrot.lane.b32.xlu0 %v128, 120
    %v133 = vpop.permute.xlu0 %132
    %134 = vrot.lane.b32.xlu0 %v129, 120
    %v135 = vpop.permute.xlu0 %134
    %v138 = vadd.f32 %v109, %v133
    %v139 = vadd.f32 %v112, %v135
    %v140 = vld [vmem:[%s6] sm:$0xff]
    %v141 = vld [vmem:[%s7] sm:$0x1]
    %v143 = vperm.slane %v141, 0
    %vm145 = vcmask 64512
    %v147 = vsel %vm145, %v138, 0
    %v150 = vsel %vm145, %v139, 0
    %152 = vmatpush.msra.mxu0 0.0
    %153 = vmatpush.msra.mxu0 0.0
    %154 = vmatpush.msra.mxu0 0.0
    %155 = vmatpush.msra.mxu0 0.0
    %156 = vmatpush.msra.mxu0 0.0
    %157 = vmatpush.msra.mxu0 0.0
    %158 = vmatpush.msra.mxu0 0.0
    %159 = vmatpush.msra.mxu0 0.0
    %160 = vmatpush.msra.mxu0 0.0
    %161 = vmatpush.msra.mxu0 0.0
    %162 = vmatpush.msra.mxu0 0.0
    %163 = vmatpush.msra.mxu0 0.0
    %164 = vmatpush.msra.mxu0 0.0
    %165 = vmatpush.msra.mxu0 0.0
    %166 = vmatpush.msra.mxu0 0.0
    %167 = vmatpush.msra.mxu0 %v140
    %168 = vmatmul.f32.gmra.mxu0 %v147
    %v169 = vpop.f32.mrf.mxu0
    %v170 = vadd.f32 %v143, %v169
    %171 = vmatmul.f32.gmra.mxu0 %v150
    %v172 = vpop.f32.mrf.mxu0
    %v173 = vadd.f32 %v143, %v172
    %174 = vdwg.mxu0
    %v175 = vmax.f32 %v170, 0.0
    %v176 = vmax.f32 %v173, 0.0
    %v177 = vld [vmem:[%s8] sm:$0xff]
    %v178 = vld [vmem:[%s8 + $0x8] sm:$0xff]
    %v179 = vld [vmem:[%s8 + $0x10] sm:$0xff]
    %v180 = vld [vmem:[%s8 + $0x18] sm:$0xff]
    %v181 = vld [vmem:[%s9] sm:$0x1]
    %v183 = vperm.slane %v181, 0
    %v186 = vsel %vm84, %v175, 0
    %v189 = vsel %vm84, %v176, 0
    %191 = vmatpush.msra.mxu0 0.0
    %192 = vmatpush.msra.mxu0 0.0
    %193 = vmatpush.msra.mxu0 0.0
    %194 = vmatpush.msra.mxu0 0.0
    %195 = vmatpush.msra.mxu0 0.0
    %196 = vmatpush.msra.mxu0 0.0
    %197 = vmatpush.msra.mxu0 0.0
    %198 = vmatpush.msra.mxu0 0.0
    %199 = vmatpush.msra.mxu0 0.0
    %200 = vmatpush.msra.mxu0 0.0
    %201 = vmatpush.msra.mxu0 0.0
    %202 = vmatpush.msra.mxu0 0.0
    %203 = vmatpush.msra.mxu0 %v180
    %204 = vmatpush.msra.mxu0 %v179
    %205 = vmatpush.msra.mxu0 %v178
    %206 = vmatpush.msra.mxu0 %v177
    %207 = vmatmul.f32.gmra.mxu0 %v186
    %v208 = vpop.f32.mrf.mxu0
    %v209 = vadd.f32 %v183, %v208
    %210 = vmatmul.f32.gmra.mxu0 %v189
    %v211 = vpop.f32.mrf.mxu0
    %v212 = vadd.f32 %v183, %v211
    %213 = vdwg.mxu0
    %216 = vrot.lane.b32.xlu0 %v109, 16
    %v217 = vpop.permute.xlu0 %216
    %218 = vrot.lane.b32.xlu0 %v112, 16
    %v219 = vpop.permute.xlu0 %218
    %224 = vrot.lane.b32.xlu0 %v115, 16
    %v225 = vpop.permute.xlu0 %224
    %226 = vrot.lane.b32.xlu0 %v117, 16
    %v227 = vpop.permute.xlu0 %226
    %v230 = vsel %vm44, %v209, %v217
    %v231 = vsel %vm44, %v212, %v219
    %vm232 = vcmask 195584
    %v233 = vsel %vm232, %v230, %v225
    %v234 = vsel %vm232, %v231, %v227
    %235 = vst.msk [vmem:[#allocation2] sm:$0xff] %vm84, %v233
    %236 = vst.msk [vmem:[#allocation2 + $0x8] sm:$0xff] %vm84, %v234
    // Predicated region
    $region42: #{tpu_custom_call.1} parent=1 // pred_check
      _
    $region43: #{tpu_custom_call.1} parent=1 // pred_check_branch
      %238 = sbr.rel (0) target = $region45
    $region44: #{tpu_custom_call.1} parent=1 // pred_region
      %240 = vsyncadd [#allocation3], 0
      %s241 = sshll.u32 [#allocation2], 4
      %s242 = int_to_ptr.vmem [resolvable:$true] %s241
      %s243 = sshll.u32 %s10, 4
      %s244 = int_to_ptr.hbm [resolvable:$true] %s243
      %249 = dma.vmem_to_hbm [thread:$0]  %s242, 256, %s244, [#allocation3], 128, 128, 8
    $region45: #{tpu_custom_call.1} parent=1 // pred_fallthru
      _
    // Predicated region
    $region46: #{tpu_custom_call.1} parent=1 // pred_check
      _
    $region47: #{tpu_custom_call.1} parent=1 // pred_check_branch
      %251 = sbr.rel (0) target = $region49
    $region48: #{tpu_custom_call.1} parent=1 // pred_region
      %253 = dma.done [#allocation3], 256
    $region49: #{tpu_custom_call.1} parent=1 // pred_fallthru
      _
    %254 = vsyncpa [#allocation3], 1

</llo_original>
